<compile_context>
chip_gen: v7x
topology: tpu7x:2x2x1
jax: 0.10.0
libtpu: 0.0.40
codegen_flags: <defaults>
</compile_context>

<pallas_src>
import functools

import jax
import jax.numpy as jnp
from jax.experimental import pallas as pl
from jax.experimental.pallas import tpu as pltpu

_VMEM_LIMIT = 48 * 1024 * 1024            # fits v7x (64 MiB) and v5e/v6e (128 MiB)
_HPROJ_RESIDENT_BYTES = 8 * 1024 * 1024   # resident h_proj (double-buffered) stays small


def _round_up(x, m):
    return (x + m - 1) // m * m


# ---------------------------------------------------------------------------
# Kernel 1: neighbour projection  h_proj = h @ W_neigh
# (hoisted out of the aggregation reduction loop — runs exactly once per layer)
# ---------------------------------------------------------------------------
def _proj_kernel(h_ref, w_ref, out_ref):
    out_ref[...] = jnp.dot(
        h_ref[...], w_ref[...], preferred_element_type=jnp.float32
    ).astype(out_ref.dtype)


def _project(h_p, w_p):
    """(rows, in_pad) @ (in_pad, out_pad) -> bf16 (rows, out_pad), row-tiled."""
    rows, in_pad = h_p.shape
    out_pad = w_p.shape[1]
    tr = 256 if rows % 256 == 0 else 128
    # TODO(synk): add a K-reduction grid axis if in_pad ever exceeds ~8K
    #             (a single (tr, in_pad) bf16 tile is assumed to fit VMEM).
    return pl.pallas_call(
        _proj_kernel,
        out_shape=jax.ShapeDtypeStruct((rows, out_pad), jnp.bfloat16),
        grid_spec=pltpu.PrefetchScalarGridSpec(
            num_scalar_prefetch=0,
            grid=(rows // tr,),
            in_specs=[
                pl.BlockSpec((tr, in_pad), lambda r: (r, 0)),
                pl.BlockSpec((in_pad, out_pad), lambda r: (0, 0)),  # constant -> 1 DMA
            ],
            out_specs=pl.BlockSpec((tr, out_pad), lambda r: (r, 0)),
        ),
        compiler_params=pltpu.CompilerParams(
            dimension_semantics=("parallel",),
            vmem_limit_bytes=_VMEM_LIMIT,
        ),
        cost_estimate=pl.CostEstimate(
            flops=int(2 * rows * in_pad * out_pad),
            transcendentals=0,
            bytes_accessed=int((rows * in_pad + in_pad * out_pad + rows * out_pad) * 2),
        ),
    )(h_p, w_p)


# ---------------------------------------------------------------------------
# Kernel 2: fused mean-aggregation + self path + bias (+ReLU)
#   out[m] = inv_deg[m] * sum_k adj01[m,k] @ h_proj[k] + h_dst[m] @ W_self + b
# ---------------------------------------------------------------------------
def _sage_agg_kernel(adj_ref, hproj_ref, hdst_ref, wself_ref, bias_ref,
                     invdeg_ref, out_ref, acc_ref, *,
                     apply_relu, tk, hproj_resident):
    k = pl.program_id(1)
    k_last = pl.num_programs(1) - 1

    @pl.when(k == 0)
    def _init():
        acc_ref[...] = jnp.zeros_like(acc_ref)

    if hproj_resident:
        # full h_proj sits in VMEM (constant index_map, DMA'd once); slice the
        # K-tile for this grid step.
        hp = hproj_ref[pl.ds(pl.multiple_of(k * tk, tk), tk), :]
    else:
        hp = hproj_ref[...]
    acc_ref[...] += jnp.dot(adj_ref[...], hp, preferred_element_type=jnp.float32)

    @pl.when(k == k_last)
    def _finalize():
        # single fused RMW: inv_deg scaling + self projection + bias (+ ReLU)
        out = (acc_ref[...] * invdeg_ref[...]
               + jnp.dot(hdst_ref[...], wself_ref[...],
                         preferred_element_type=jnp.float32)
               + bias_ref[...])
        if apply_relu:
            out = jnp.maximum(out, 0.0)
        out_ref[...] = out.astype(out_ref.dtype)


def sage_conv(adj, h_src, ws_p, wn_p, b_p, in_dim, out_dim, *,
              apply_relu, out_dtype):
    """One SAGEConv('mean') layer.

    adj   : (n_dst, n_src) row-normalized dense adjacency (f32)
    h_src : (n_src, in_dim) f32 or bf16 source-node features
    ws_p  : (in_pad, out_pad) bf16, pre-padded fc_self.weight.T
    wn_p  : (in_pad, out_pad) bf16, pre-padded fc_neigh.weight.T
    b_p   : (1, out_pad) f32, pre-padded bias
    """
    n_dst, n_src = adj.shape
    in_pad, out_pad = ws_p.shape
    assert n_dst <= n_src, "DGL block convention: dst nodes are a src prefix"

    # tm=128 keeps both v7x TensorCores fed when n_dst is small; a larger
    # reduction tile tk cuts grid-step overhead and accumulator RMW passes.
    tm = 256 if n_dst >= 1024 else 128
    tk = min(512, _round_up(n_src, 128))
    m_pad = _round_up(n_dst, tm)
    k_pad = _round_up(n_src, tk)
    m_tiles, k_tiles = m_pad // tm, k_pad // tk

    # 0/1 adjacency (exact in bf16) + f32 inverse degree applied in the epilogue
    # (removes bf16 rounding of 1/deg from the mean aggregation).
    adj01 = (adj != 0).astype(jnp.float32)
    deg = jnp.sum(adj01, axis=1, keepdims=True)
    inv_deg = jnp.where(deg > 0, 1.0 / jnp.maximum(deg, 1.0), 0.0)
    adj_p = jnp.zeros((m_pad, k_pad), jnp.bfloat16
                      ).at[:n_dst, :n_src].set(adj01.astype(jnp.bfloat16))
    invdeg_p = jnp.zeros((m_pad, 1), jnp.float32).at[:n_dst].set(inv_deg)

    # Padded bf16 activations; padded dst rows are zero so the self path is
    # exactly zero there (they are sliced off below anyway).
    h_bf = h_src.astype(jnp.bfloat16)
    h_p = jnp.zeros((k_pad, in_pad), jnp.bfloat16).at[:n_src, :in_dim].set(h_bf)
    hdst_p = jnp.zeros((m_pad, in_pad), jnp.bfloat16
                       ).at[:n_dst, :in_dim].set(h_bf[:n_dst])

    # Hoisted neighbour projection: computed once, so the aggregation kernel
    # only streams out_pad-wide tiles.
    hproj_p = _project(h_p, wn_p)                       # (k_pad, out_pad) bf16

    hproj_resident = (k_pad * out_pad * 2) <= _HPROJ_RESIDENT_BYTES
    if hproj_resident:
        hproj_spec = pl.BlockSpec((k_pad, out_pad), lambda m, k: (0, 0))
    else:
        hproj_spec = pl.BlockSpec((tk, out_pad), lambda m, k: (k, 0))

    kernel = functools.partial(_sage_agg_kernel, apply_relu=apply_relu,
                               tk=tk, hproj_resident=hproj_resident)

    flops = 2 * m_pad * k_pad * out_pad + 2 * m_pad * in_pad * out_pad
    hproj_bytes = k_pad * out_pad * 2 * (1 if hproj_resident else m_tiles)
    bytes_accessed = (adj_p.size * 2 + hproj_bytes + hdst_p.size * 2
                      + ws_p.size * 2 + b_p.size * 4 + invdeg_p.size * 4
                      + m_pad * out_pad * jnp.dtype(out_dtype).itemsize)

    out = pl.pallas_call(
        kernel,
        out_shape=jax.ShapeDtypeStruct((m_pad, out_pad), out_dtype),
        grid_spec=pltpu.PrefetchScalarGridSpec(
            num_scalar_prefetch=0,
            grid=(m_tiles, k_tiles),
            in_specs=[
                pl.BlockSpec((tm, tk), lambda m, k: (m, k)),          # adj01
                hproj_spec,                                           # h_proj
                pl.BlockSpec((tm, in_pad), lambda m, k: (m, 0)),      # h_dst
                pl.BlockSpec((in_pad, out_pad), lambda m, k: (0, 0)), # W_self
                pl.BlockSpec((1, out_pad), lambda m, k: (0, 0)),      # bias
                pl.BlockSpec((tm, 1), lambda m, k: (m, 0)),           # inv_deg
            ],
            out_specs=pl.BlockSpec((tm, out_pad), lambda m, k: (m, 0)),
            scratch_shapes=[pltpu.VMEM((tm, out_pad), jnp.float32)],
        ),
        compiler_params=pltpu.CompilerParams(
            dimension_semantics=("parallel", "arbitrary"),
            vmem_limit_bytes=_VMEM_LIMIT,
        ),
        cost_estimate=pl.CostEstimate(flops=int(flops), transcendentals=0,
                                      bytes_accessed=int(bytes_accessed)),
    )(adj_p, hproj_p, hdst_p, ws_p, b_p, invdeg_p)

    return out[:n_dst, :out_dim]


class DistSAGEPallas:
    """Mirror of DistSAGE.__init__ parameter shapes, deterministic init.

    Weights are padded to 128-lane multiples and cast to bf16 once at init,
    not per forward call.
    """

    def __init__(self, in_feats, n_hidden, n_classes, n_layers, key):
        self.n_layers = n_layers
        dims = [in_feats] + [n_hidden] * (n_layers - 1) + [n_classes]
        self.dims = dims
        self.params = []    # raw f32 (for the pure-JAX reference)
        self.padded = []    # (ws_p, wn_p, b_p) padded bf16/bf16/f32
        for li in range(n_layers):
            k1, k2, key = jax.random.split(key, 3)
            d_in, d_out = dims[li], dims[li + 1]
            scale = 1.0 / jnp.sqrt(jnp.float32(d_in))
            w_self = jax.random.normal(k1, (d_in, d_out), jnp.float32) * scale
            w_neigh = jax.random.normal(k2, (d_in, d_out), jnp.float32) * scale
            bias = jnp.zeros((1, d_out), jnp.float32)
            self.params.append((w_self, w_neigh, bias))
            in_pad, out_pad = _round_up(d_in, 128), _round_up(d_out, 128)
            ws_p = jnp.zeros((in_pad, out_pad), jnp.bfloat16
                             ).at[:d_in, :d_out].set(w_self.astype(jnp.bfloat16))
            wn_p = jnp.zeros((in_pad, out_pad), jnp.bfloat16
                             ).at[:d_in, :d_out].set(w_neigh.astype(jnp.bfloat16))
            b_p = jnp.zeros((1, out_pad), jnp.float32).at[:, :d_out].set(bias)
            self.padded.append((ws_p, wn_p, b_p))

    def forward(self, blocks, x):
        """blocks: list of row-normalized dense adjacencies (num_dst, num_src)."""
        h = x
        for i, (adj, (ws_p, wn_p, b_p)) in enumerate(zip(blocks, self.padded)):
            last = (i == self.n_layers - 1)
            # Hidden activations are stored as bf16 (halves store/load bytes and
            # is numerically identical to storing f32 then casting next layer).
            h = sage_conv(adj, h, ws_p, wn_p, b_p,
                          self.dims[i], self.dims[i + 1],
                          apply_relu=not last,
                          out_dtype=jnp.float32 if last else jnp.bfloat16)
            # TODO(synk): dropout is eval-mode identity (see header).
        return h


def forward_reference(blocks, params, x, n_layers):
    """Pure-JAX f32 reference of the same forward pass."""
    h = x
    for i, (adj, (w_self, w_neigh, bias)) in enumerate(zip(blocks, params)):
        n_dst = adj.shape[0]
        h_dst = h[:n_dst]
        h_neigh = adj @ h
        out = h_dst @ w_self + h_neigh @ w_neigh + bias
        if i != n_layers - 1:
            out = jnp.maximum(out, 0.0)
        h = out
    return h


def make_block(key, num_dst, num_src, avg_deg=4):
    """Dense random bipartite block, row-normalized for mean aggregation.

    No forced self-loops: zero in-degree dst rows stay all-zero, matching
    DGL SAGEConv('mean') (h_neigh = 0 for such nodes).
    """
    p = avg_deg / num_src
    adj = (jax.random.uniform(key, (num_dst, num_src)) < p).astype(jnp.float32)
    deg = jnp.sum(adj, axis=1, keepdims=True)
    return adj / jnp.maximum(deg, 1.0)


if __name__ == "__main__":
    key = jax.random.PRNGKey(0)
    k_feat, k_b0, k_b1, k_model = jax.random.split(key, 4)

    in_feats, n_hidden, n_classes, n_layers = 16, 32, 8, 2
    num_src0, num_dst0, num_dst1 = 64, 32, 16   # sampled block node counts

    x = jax.random.normal(k_feat, (num_src0, in_feats), jnp.float32)
    blocks = [
        make_block(k_b0, num_dst0, num_src0),   # layer 0: 64 src -> 32 dst
        make_block(k_b1, num_dst1, num_dst0),   # layer 1: 32 src -> 16 dst
    ]

    model = DistSAGEPallas(in_feats, n_hidden, n_classes, n_layers, k_model)
    out = model.forward(blocks, x)
    out = jax.block_until_ready(out)

    assert out.shape == (num_dst1, n_classes)
    assert out.dtype == jnp.float32

    ref = forward_reference(blocks, model.params, x, n_layers)
    assert jnp.all(jnp.isfinite(out))
    assert jnp.allclose(out, ref, rtol=1e-1, atol=1e-1), (
        f"max abs err {jnp.max(jnp.abs(out - ref))}")

    print("KERNEL_OK")
</pallas_src>

<mosaic_0001>
module attributes {stable_mosaic.version = 11 : i64} {
  func.func @_proj_kernel(%arg0: i32, %arg1: memref<128x128xbf16, #tpu.memory_space<vmem>>, %arg2: memref<128x128xbf16, #tpu.memory_space<vmem>>, %arg3: memref<128x128xbf16, #tpu.memory_space<vmem>>) attributes {dimension_semantics = [#tpu.dimension_semantics<parallel>], iteration_bounds = array<i64: 1>, scalar_prefetch = 0 : i64, scratch_operands = 0 : i64, tpu.core_type = #tpu.core_type<tc>, window_params = [{transform_indices = @transform_0, window_bounds = array<i64: 128, 128>}, {pipeline_mode = #tpu.pipeline_mode<synchronous>, transform_indices = @transform_1, window_bounds = array<i64: 128, 128>}, {transform_indices = @transform_2, window_bounds = array<i64: 128, 128>}]} {
    %c0 = arith.constant 0 : index
    %c0_0 = arith.constant 0 : index
    %0 = vector.load %arg1[%c0, %c0_0] : memref<128x128xbf16, #tpu.memory_space<vmem>>, vector<128x128xbf16>
    %c0_1 = arith.constant 0 : index
    %c0_2 = arith.constant 0 : index
    %1 = vector.load %arg2[%c0_1, %c0_2] : memref<128x128xbf16, #tpu.memory_space<vmem>>, vector<128x128xbf16>
    %cst = arith.constant dense<0.000000e+00> : vector<128x128xf32>
    %2 = tpu.matmul %0, %1, %cst {dimension_numbers = #tpu.dot_dimension_numbers<[1], [0], [0], [1], [0, 0, 1, 1], [], []>} : vector<128x128xbf16>, vector<128x128xbf16>, vector<128x128xf32> -> vector<128x128xf32>
    %3 = arith.truncf %2 : vector<128x128xf32> to vector<128x128xbf16>
    %c0_3 = arith.constant 0 : index
    %c0_4 = arith.constant 0 : index
    %4 = vector.load %arg3[%c0_3, %c0_4] : memref<128x128xbf16, #tpu.memory_space<vmem>>, vector<128x128xbf16>
    tpu.vector_store %arg3[%c0_3, %c0_4], %3 {strides = array<i32>} : memref<128x128xbf16, #tpu.memory_space<vmem>>, vector<128x128xbf16>,
    return
  }
  func.func @transform_0(%arg0: i32) -> (i32, i32) {
    %c0_i32 = arith.constant 0 : i32
    %c0_i32_0 = arith.constant 0 : i32
    return %arg0, %c0_i32 : i32, i32
  }
  func.func @transform_1(%arg0: i32) -> (i32, i32) {
    %c0_i32 = arith.constant 0 : i32
    %c0_i32_0 = arith.constant 0 : i32
    %c0_i32_1 = arith.constant 0 : i32
    return %c0_i32, %c0_i32_0 : i32, i32
  }
  func.func @transform_2(%arg0: i32) -> (i32, i32) {
    %c0_i32 = arith.constant 0 : i32
    %c0_i32_0 = arith.constant 0 : i32
    return %arg0, %c0_i32 : i32, i32
  }
}

</mosaic_0001>

<llo_original>
// kernel: tpu_custom_call.1
$region0: #{tpu_custom_call.1}
  #allocation0 [shape = 'u32[]', space=smem, size = 0x4, offset = 0x4, fixed_abs, tag = 'smem constant byte address 0x4 - core index']
  #allocation1 [shape = 'u32[144,128]{1,0:T(1,128)}', space=vmem, size = 0x12000, scoped, tag = 'internal scratch']
  %s0 = inlined_call_operand.hbm [shape: bf16[128,128], index: 0, kind: input, shape index: {}]
  %s1 = inlined_call_operand.hbm [shape: bf16[128,128], index: 1, kind: input, shape index: {}]
  %s2 = inlined_call_operand.hbm [shape: bf16[128,128], index: 2, kind: output, shape index: {}]
  %s3 = sld [smem:[#allocation0]]
  $region26: #{tpu_custom_call.1} parent=0
    _
  %s5 = ssub.s32 1, %s3
  %s6 = scalar_select 0, %s5, %s3
  $region1: #{tpu_custom_call.1} parent=0
    #allocation2 [shape = 'u8[32768]{0}', space=vmem, size = 0x8000, scoped, tag = 'input window, operand 0, single buffered']
    #allocation3 [shape = 's32[1]{0}', space=sflag, size = 0x4, scoped, tag = 'scoped memory for tpu_custom_call.1']
    #allocation4 [shape = 's32[1]{0}', space=sflag, size = 0x4, scoped, tag = 'scoped memory for tpu_custom_call.1']
    #allocation5 [shape = 'u8[32768]{0}', space=vmem, size = 0x8000, scoped, tag = 'input window, operand 1, single buffered']
    #allocation6 [shape = 's32[1]{0}', space=sflag, size = 0x4, scoped, tag = 'scoped memory for tpu_custom_call.1']
    #allocation7 [shape = 'u8[32768]{0}', space=vmem, size = 0x8000, scoped, tag = 'output window, operand 0, single buffered']
    %7 = vsyncpa [#allocation3], 0
    %8 = vsyncpa [#allocation6], 0
    %9 = vsyncpa [#allocation4], 0
    // Predicated region
    $region2: #{tpu_custom_call.1} parent=1 // pred_check
      _
    $region3: #{tpu_custom_call.1} parent=1 // pred_check_branch
      %11 = sbr.rel (0) target = $region5
    $region4: #{tpu_custom_call.1} parent=1 // pred_region
      %s13 = ssub.s32 1024, 1024
      %14 = vsyncadd [#allocation3], %s13
      %s15 = sshll.u32 [#allocation2], 4
      %s16 = int_to_ptr.vmem [resolvable:$true] %s15
      %21 = dma.hbm_to_vmem [thread:$0]  %s0, 1024, %s16, [#allocation3], 64, 64, 4
    $region5: #{tpu_custom_call.1} parent=1 // pred_fallthru
      _
    // Predicated region
    $region6: #{tpu_custom_call.1} parent=1 // pred_check
      _
    $region7: #{tpu_custom_call.1} parent=1 // pred_check_branch
      %23 = sbr.rel (0) target = $region9
    $region8: #{tpu_custom_call.1} parent=1 // pred_region
      %s25 = ssub.s32 1024, 1024
      %26 = vsyncadd [#allocation6], %s25
      %s27 = sshll.u32 [#allocation5], 4
      %s28 = int_to_ptr.vmem [resolvable:$true] %s27
      %33 = dma.hbm_to_vmem [thread:$0]  %s1, 1024, %s28, [#allocation6], 64, 64, 4
    $region9: #{tpu_custom_call.1} parent=1 // pred_fallthru
      _
    // Predicated region
    $region10: #{tpu_custom_call.1} parent=1 // pred_check
      _
    $region11: #{tpu_custom_call.1} parent=1 // pred_check_branch
      %35 = sbr.rel (0) target = $region13
    $region12: #{tpu_custom_call.1} parent=1 // pred_region
      %36 = dma.done [#allocation3], 1024
    $region13: #{tpu_custom_call.1} parent=1 // pred_fallthru
      _
    // Predicated region
    $region14: #{tpu_custom_call.1} parent=1 // pred_check
      _
    $region15: #{tpu_custom_call.1} parent=1 // pred_check_branch
      %38 = sbr.rel (0) target = $region17
    $region16: #{tpu_custom_call.1} parent=1 // pred_region
      %39 = dma.done [#allocation6], 1024
    $region17: #{tpu_custom_call.1} parent=1 // pred_fallthru
      _
    %v41 = vld [vmem:[#allocation2] sm:$0xf]
    %v42 = vld [vmem:[#allocation2 + $0x4] sm:$0xf]
    %v43 = vld [vmem:[#allocation2 + $0x8] sm:$0xf]
    %v44 = vld [vmem:[#allocation2 + $0xc] sm:$0xf]
    %v45 = vld [vmem:[#allocation2 + $0x10] sm:$0xf]
    %v46 = vld [vmem:[#allocation2 + $0x14] sm:$0xf]
    %v47 = vld [vmem:[#allocation2 + $0x18] sm:$0xf]
    %v48 = vld [vmem:[#allocation2 + $0x1c] sm:$0xf]
    %v49 = vld [vmem:[#allocation2 + $0x20] sm:$0xf]
    %v50 = vld [vmem:[#allocation2 + $0x24] sm:$0xf]
    %v51 = vld [vmem:[#allocation2 + $0x28] sm:$0xf]
    %v52 = vld [vmem:[#allocation2 + $0x2c] sm:$0xf]
    %v53 = vld [vmem:[#allocation2 + $0x30] sm:$0xf]
    %v54 = vld [vmem:[#allocation2 + $0x34] sm:$0xf]
    %v55 = vld [vmem:[#allocation2 + $0x38] sm:$0xf]
    %v56 = vld [vmem:[#allocation2 + $0x3c] sm:$0xf]
    %v57 = vld [vmem:[#allocation5] sm:$0xf]
    %v58 = vld [vmem:[#allocation5 + $0x4] sm:$0xf]
    %v59 = vld [vmem:[#allocation5 + $0x8] sm:$0xf]
    %v60 = vld [vmem:[#allocation5 + $0xc] sm:$0xf]
    %v61 = vld [vmem:[#allocation5 + $0x10] sm:$0xf]
    %v62 = vld [vmem:[#allocation5 + $0x14] sm:$0xf]
    %v63 = vld [vmem:[#allocation5 + $0x18] sm:$0xf]
    %v64 = vld [vmem:[#allocation5 + $0x1c] sm:$0xf]
    %v65 = vld [vmem:[#allocation5 + $0x20] sm:$0xf]
    %v66 = vld [vmem:[#allocation5 + $0x24] sm:$0xf]
    %v67 = vld [vmem:[#allocation5 + $0x28] sm:$0xf]
    %v68 = vld [vmem:[#allocation5 + $0x2c] sm:$0xf]
    %v69 = vld [vmem:[#allocation5 + $0x30] sm:$0xf]
    %v70 = vld [vmem:[#allocation5 + $0x34] sm:$0xf]
    %v71 = vld [vmem:[#allocation5 + $0x38] sm:$0xf]
    %v72 = vld [vmem:[#allocation5 + $0x3c] sm:$0xf]
    %v89 = vunpack.c.l.b16 %v41
    %v90 = vunpack.c.l.b16 %v42
    %v91 = vunpack.c.l.b16 %v43
    %v92 = vunpack.c.l.b16 %v44
    %v93 = vunpack.c.l.b16 %v45
    %v94 = vunpack.c.l.b16 %v46
    %v95 = vunpack.c.l.b16 %v47
    %v96 = vunpack.c.l.b16 %v48
    %v97 = vunpack.c.l.b16 %v49
    %v98 = vunpack.c.l.b16 %v50
    %v99 = vunpack.c.l.b16 %v51
    %v100 = vunpack.c.l.b16 %v52
    %v101 = vunpack.c.l.b16 %v53
    %v102 = vunpack.c.l.b16 %v54
    %v103 = vunpack.c.l.b16 %v55
    %v104 = vunpack.c.l.b16 %v56
    %v105 = vpack.c.b16 %v90, %v89
    %v106 = vpack.c.b16 %v92, %v91
    %v107 = vpack.c.b16 %v94, %v93
    %v108 = vpack.c.b16 %v96, %v95
    %v109 = vpack.c.b16 %v98, %v97
    %v110 = vpack.c.b16 %v100, %v99
    %v111 = vpack.c.b16 %v102, %v101
    %v112 = vpack.c.b16 %v104, %v103
    %v137 = vunpack.c.l.b16 %v57
    %v138 = vunpack.c.l.b16 %v58
    %v139 = vunpack.c.l.b16 %v59
    %v140 = vunpack.c.l.b16 %v60
    %v141 = vunpack.c.l.b16 %v61
    %v142 = vunpack.c.l.b16 %v62
    %v143 = vunpack.c.l.b16 %v63
    %v144 = vunpack.c.l.b16 %v64
    %v145 = vunpack.c.l.b16 %v65
    %v146 = vunpack.c.l.b16 %v66
    %v147 = vunpack.c.l.b16 %v67
    %v148 = vunpack.c.l.b16 %v68
    %v149 = vunpack.c.l.b16 %v69
    %v150 = vunpack.c.l.b16 %v70
    %v151 = vunpack.c.l.b16 %v71
    %v152 = vunpack.c.l.b16 %v72
    %v153 = vpack.c.b16 %v138, %v137
    %v154 = vpack.c.b16 %v140, %v139
    %v155 = vpack.c.b16 %v142, %v141
    %v156 = vpack.c.b16 %v144, %v143
    %v157 = vpack.c.b16 %v146, %v145
    %v158 = vpack.c.b16 %v148, %v147
    %v159 = vpack.c.b16 %v150, %v149
    %v160 = vpack.c.b16 %v152, %v151
    %169 = vmatprep.subr.bf16.mxu0 0
    %170 = vmatpush1.bf16.msra.mxu0 %v153
    %171 = vmatprep.subr.bf16.mxu0 0
    %172 = vmatpush1.bf16.msra.mxu0 %v154
    %173 = vmatprep.subr.bf16.mxu0 0
    %174 = vmatpush1.bf16.msra.mxu0 %v155
    %175 = vmatprep.subr.bf16.mxu0 0
    %176 = vmatpush1.bf16.msra.mxu0 %v156
    %177 = vmatprep.subr.bf16.mxu0 0
    %178 = vmatpush1.bf16.msra.mxu0 %v157
    %179 = vmatprep.subr.bf16.mxu0 0
    %180 = vmatpush1.bf16.msra.mxu0 %v158
    %181 = vmatprep.subr.bf16.mxu0 0
    %182 = vmatpush1.bf16.msra.mxu0 %v159
    %183 = vmatprep.subr.bf16.mxu0 0
    %184 = vmatpush1.bf16.msra.mxu0 %v160
    %185 = vmatprep.subr.bf16.mxu0 0
    %186 = vmatpush1.bf16.msra.mxu0 0
    %187 = vmatprep.subr.bf16.mxu0 0
    %188 = vmatpush1.bf16.msra.mxu0 0
    %189 = vmatprep.subr.bf16.mxu0 0
    %190 = vmatpush1.bf16.msra.mxu0 0
    %191 = vmatprep.subr.bf16.mxu0 0
    %192 = vmatpush1.bf16.msra.mxu0 0
    %193 = vmatprep.subr.bf16.mxu0 0
    %194 = vmatpush1.bf16.msra.mxu0 0
    %195 = vmatprep.subr.bf16.mxu0 0
    %196 = vmatpush1.bf16.msra.mxu0 0
    %197 = vmatprep.subr.bf16.mxu0 0
    %198 = vmatpush1.bf16.msra.mxu0 0
    %199 = vmatprep.subr.bf16.mxu0 0
    %200 = vmatpush1.bf16.msra.mxu0 0
    %201 = vmatprep.mubr.bf16.mxu0 0
    %202 = vmatmul.mubr.bf16.gmra.mrb[0].mxu0 %v105
    %v203 = vpop.f32.mrb[0].mxu0
    %v204 = vadd.f32 0.0, %v203
    %v205 = vpop.f32.mrb[0].mxu0
    %v206 = vpop.f32.mrb[0].mxu0
    %v207 = vadd.f32 0.0, %v206
    %v208 = vpop.f32.mrb[0].mxu0
    %209 = vmatprep.mubr.bf16.mxu0 0
    %210 = vmatmul.mubr.bf16.gmra.mrb[0].mxu0 %v106
    %v211 = vpop.f32.mrb[0].mxu0
    %v212 = vadd.f32 0.0, %v211
    %v213 = vpop.f32.mrb[0].mxu0
    %v214 = vpop.f32.mrb[0].mxu0
    %v215 = vadd.f32 0.0, %v214
    %v216 = vpop.f32.mrb[0].mxu0
    %217 = vmatprep.mubr.bf16.mxu0 0
    %218 = vmatmul.mubr.bf16.gmra.mrb[0].mxu0 %v107
    %v219 = vpop.f32.mrb[0].mxu0
    %v220 = vadd.f32 0.0, %v219
    %v221 = vpop.f32.mrb[0].mxu0
    %v222 = vpop.f32.mrb[0].mxu0
    %v223 = vadd.f32 0.0, %v222
    %v224 = vpop.f32.mrb[0].mxu0
    %225 = vmatprep.mubr.bf16.mxu0 0
    %226 = vmatmul.mubr.bf16.gmra.mrb[0].mxu0 %v108
    %v227 = vpop.f32.mrb[0].mxu0
    %v228 = vadd.f32 0.0, %v227
    %v229 = vpop.f32.mrb[0].mxu0
    %v230 = vpop.f32.mrb[0].mxu0
    %v231 = vadd.f32 0.0, %v230
    %v232 = vpop.f32.mrb[0].mxu0
    %233 = vmatprep.mubr.bf16.mxu0 0
    %234 = vmatmul.mubr.bf16.gmra.mrb[0].mxu0 %v109
    %v235 = vpop.f32.mrb[0].mxu0
    %v236 = vadd.f32 0.0, %v235
    %v237 = vpop.f32.mrb[0].mxu0
    %v238 = vpop.f32.mrb[0].mxu0
    %v239 = vadd.f32 0.0, %v238
    %v240 = vpop.f32.mrb[0].mxu0
    %241 = vmatprep.mubr.bf16.mxu0 0
    %242 = vmatmul.mubr.bf16.gmra.mrb[0].mxu0 %v110
    %v243 = vpop.f32.mrb[0].mxu0
    %v244 = vadd.f32 0.0, %v243
    %v245 = vpop.f32.mrb[0].mxu0
    %v246 = vpop.f32.mrb[0].mxu0
    %v247 = vadd.f32 0.0, %v246
    %v248 = vpop.f32.mrb[0].mxu0
    %249 = vmatprep.mubr.bf16.mxu0 0
    %250 = vmatmul.mubr.bf16.gmra.mrb[0].mxu0 %v111
    %v251 = vpop.f32.mrb[0].mxu0
    %v252 = vadd.f32 0.0, %v251
    %v253 = vpop.f32.mrb[0].mxu0
    %v254 = vpop.f32.mrb[0].mxu0
    %v255 = vadd.f32 0.0, %v254
    %v256 = vpop.f32.mrb[0].mxu0
    %257 = vmatprep.mubr.bf16.mxu0 0
    %258 = vmatmul.mubr.bf16.gmra.mrb[0].mxu0 %v112
    %v259 = vpop.f32.mrb[0].mxu0
    %v260 = vadd.f32 0.0, %v259
    %v261 = vpop.f32.mrb[0].mxu0
    %v262 = vpop.f32.mrb[0].mxu0
    %v263 = vadd.f32 0.0, %v262
    %v264 = vpop.f32.mrb[0].mxu0
    %265 = vdwg.mxu0
    %v266 = vpack.c.bf16 %v207, %v204
    %v267 = vpack.c.bf16 %v215, %v212
    %v268 = vpack.c.bf16 %v223, %v220
    %v269 = vpack.c.bf16 %v231, %v228
    %v270 = vpack.c.bf16 %v239, %v236
    %v271 = vpack.c.bf16 %v247, %v244
    %v272 = vpack.c.bf16 %v255, %v252
    %v273 = vpack.c.bf16 %v263, %v260
    %v282 = vunpack.c.l.b16 %v266
    %v283 = vunpack.c.h.b16 %v266
    %v284 = vunpack.c.l.b16 %v267
    %v285 = vunpack.c.h.b16 %v267
    %v286 = vunpack.c.l.b16 %v268
    %v287 = vunpack.c.h.b16 %v268
    %v288 = vunpack.c.l.b16 %v269
    %v289 = vunpack.c.h.b16 %v269
    %v290 = vunpack.c.l.b16 %v270
    %v291 = vunpack.c.h.b16 %v270
    %v292 = vunpack.c.l.b16 %v271
    %v293 = vunpack.c.h.b16 %v271
    %v294 = vunpack.c.l.b16 %v272
    %v295 = vunpack.c.h.b16 %v272
    %v296 = vunpack.c.l.b16 %v273
    %v297 = vunpack.c.h.b16 %v273
    %v298 = vpack.c.b16 %v282, %v282
    %v299 = vpack.c.b16 %v283, %v283
    %v300 = vpack.c.b16 %v284, %v284
    %v301 = vpack.c.b16 %v285, %v285
    %v302 = vpack.c.b16 %v286, %v286
    %v303 = vpack.c.b16 %v287, %v287
    %v304 = vpack.c.b16 %v288, %v288
    %v305 = vpack.c.b16 %v289, %v289
    %v306 = vpack.c.b16 %v290, %v290
    %v307 = vpack.c.b16 %v291, %v291
    %v308 = vpack.c.b16 %v292, %v292
    %v309 = vpack.c.b16 %v293, %v293
    %v310 = vpack.c.b16 %v294, %v294
    %v311 = vpack.c.b16 %v295, %v295
    %v312 = vpack.c.b16 %v296, %v296
    %v313 = vpack.c.b16 %v297, %v297
    %330 = vst [vmem:[#allocation7] sm:$0xf] %v298
    %331 = vst [vmem:[#allocation7 + $0x4] sm:$0xf] %v299
    %332 = vst [vmem:[#allocation7 + $0x8] sm:$0xf] %v300
    %333 = vst [vmem:[#allocation7 + $0xc] sm:$0xf] %v301
    %334 = vst [vmem:[#allocation7 + $0x10] sm:$0xf] %v302
    %335 = vst [vmem:[#allocation7 + $0x14] sm:$0xf] %v303
    %336 = vst [vmem:[#allocation7 + $0x18] sm:$0xf] %v304
    %337 = vst [vmem:[#allocation7 + $0x1c] sm:$0xf] %v305
    %338 = vst [vmem:[#allocation7 + $0x20] sm:$0xf] %v306
    %339 = vst [vmem:[#allocation7 + $0x24] sm:$0xf] %v307
    %340 = vst [vmem:[#allocation7 + $0x28] sm:$0xf] %v308
    %341 = vst [vmem:[#allocation7 + $0x2c] sm:$0xf] %v309
    %342 = vst [vmem:[#allocation7 + $0x30] sm:$0xf] %v310
    %343 = vst [vmem:[#allocation7 + $0x34] sm:$0xf] %v311
    %344 = vst [vmem:[#allocation7 + $0x38] sm:$0xf] %v312
    %345 = vst [vmem:[#allocation7 + $0x3c] sm:$0xf] %v313
    // Predicated region
    $region18: #{tpu_custom_call.1} parent=1 // pred_check
      _
    $region19: #{tpu_custom_call.1} parent=1 // pred_check_branch
      %347 = sbr.rel (0) target = $region21
    $region20: #{tpu_custom_call.1} parent=1 // pred_region
      %s349 = ssub.s32 1024, 1024
      %350 = vsyncadd [#allocation4], %s349
      %s351 = sshll.u32 [#allocation7], 4
      %s352 = int_to_ptr.vmem [resolvable:$true] %s351
      %357 = dma.vmem_to_hbm [thread:$0]  %s352, 1024, %s2, [#allocation4], 64, 64, 4
    $region21: #{tpu_custom_call.1} parent=1 // pred_fallthru
      _
    // Predicated region
    $region22: #{tpu_custom_call.1} parent=1 // pred_check
      _
    $region23: #{tpu_custom_call.1} parent=1 // pred_check_branch
      %359 = sbr.rel (0) target = $region25
    $region24: #{tpu_custom_call.1} parent=1 // pred_region
      %360 = dma.done [#allocation4], 1024
    $region25: #{tpu_custom_call.1} parent=1 // pred_fallthru
      _
    %361 = vsyncpa [#allocation3], 1
    %362 = vsyncpa [#allocation6], 1
    %363 = vsyncpa [#allocation4], 1

</llo_original>
